<compile_context>
chip_gen: v5e
topology: v5e:2x2
jax: 0.10.0
libtpu: 0.0.40
codegen_flags: <defaults>
</compile_context>

<pallas_src>
import jax
import jax.numpy as jnp
from jax.experimental import pallas as pl
from jax.experimental.pallas import tpu as pltpu

_SUBLANE = 8
_LANE = 128
_BLOCK_BYTES = 6 * 1024 * 1024      # target bytes of x per block
_VMEM_LIMIT = 64 * 1024 * 1024      # raised scoped-VMEM limit (free on all gens)


def _round_up(x, m):
    return (x + m - 1) // m * m


def _round_down(x, m):
    return x // m * m


# ----------------------------------------------------------------------------
# Pallas kernel
# ----------------------------------------------------------------------------

def _normalize_kernel(x_ref, scale_ref, bias_ref, o_ref):
    # x_ref: (TR, TL); scale/bias: (TR, 1) f32, broadcast along the lane axis.
    x = x_ref[...].astype(jnp.float32)
    o_ref[...] = (x * scale_ref[...] + bias_ref[...]).astype(o_ref.dtype)


def pallas_normalize_2d(x2d, scale_col, bias_col):
    """out[r, l] = x2d[r, l] * scale_col[r, 0] + bias_col[r, 0].

    x2d: [R, L] float array (dtype preserved); scale_col/bias_col: [R, 1] f32.
    Lane-dense, row x lane tiled, pipelined, fully parallel grid.
    """
    R, L = x2d.shape
    itemsize = jnp.dtype(x2d.dtype).itemsize

    # ---- lane (last-dim) tile -------------------------------------------------
    if L % _LANE == 0 and _SUBLANE * L * itemsize > _BLOCK_BYTES:
        TL = max(_LANE, _round_down(_BLOCK_BYTES // (_SUBLANE * itemsize), _LANE))
    else:
        # Full lane extent: covers L < 128, unaligned L (masked vst on the tail
        # only — no pad/slice HBM passes) and everything that fits the budget.
        # TODO(synk): lane-tile the rare unaligned-L case that exceeds the VMEM
        # budget instead of using a single full-extent lane block.
        TL = L
    n_lane = pl.cdiv(L, TL)

    # ---- row (second-to-last) tile ---------------------------------------------
    if R < _SUBLANE:
        TR = R                                     # full extent; no sub-8 raggedness
    else:
        row_bytes = TL * itemsize
        TR = max(_SUBLANE, _round_down(_BLOCK_BYTES // row_bytes, _SUBLANE))
        if R >= 2 * _SUBLANE:                      # >=2 row blocks for dual-TC v7x
            TR = min(TR, _round_up(pl.cdiv(R, 2), _SUBLANE))
        TR = min(TR, _round_down(R, _SUBLANE))     # every block at least partly in-bounds
        # Spread rows evenly over the blocks to minimise ragged-tail waste.
        nb = pl.cdiv(R, TR)
        TR = max(_SUBLANE, _round_up(pl.cdiv(R, nb), _SUBLANE))
    n_row = pl.cdiv(R, TR)

    return pl.pallas_call(
        _normalize_kernel,
        out_shape=jax.ShapeDtypeStruct((R, L), x2d.dtype),
        grid=(n_row, n_lane),
        in_specs=[
            pl.BlockSpec((TR, TL), lambda i, j: (i, j)),
            # Per-block (TR, 1) columns: boundary handling always matches the x
            # block and the per-step DMA is negligible.
            pl.BlockSpec((TR, 1), lambda i, j: (i, 0)),
            pl.BlockSpec((TR, 1), lambda i, j: (i, 0)),
        ],
        out_specs=pl.BlockSpec((TR, TL), lambda i, j: (i, j)),
        compiler_params=pltpu.CompilerParams(
            dimension_semantics=("parallel", "parallel"),
            vmem_limit_bytes=_VMEM_LIMIT),
        cost_estimate=pl.CostEstimate(
            flops=2 * R * L,
            transcendentals=0,
            bytes_accessed=2 * R * L * itemsize + 8 * R),
    )(x2d, scale_col, bias_col)


# ----------------------------------------------------------------------------
# Module wrapper: Normalize.forward
# ----------------------------------------------------------------------------

def _per_channel(v, C):
    v = jnp.asarray(v, jnp.float32).reshape(-1)
    if v.size == 1:
        v = jnp.broadcast_to(v, (C,))
    assert v.shape == (C,), f"mu/std must be scalar or per-channel, got {v.shape}"
    return v


def normalize_forward(x_nchw, mu, std):
    """Equivalent of Normalize(mu, std).forward(x) for NCHW x (dtype-preserving)."""
    x = jnp.asarray(x_nchw)
    N, C, H, W = x.shape
    mu_c = _per_channel(mu, C)
    std_c = _per_channel(std, C)

    # O(C) work in the wrapper: exact f32 reciprocal and fused bias.
    scale_c = 1.0 / std_c
    bias_c = -mu_c * scale_c

    # rows = (n, c) flattened; per-row columns repeat the per-channel values.
    scale_row = jnp.tile(scale_c, N).reshape(N * C, 1)
    bias_row = jnp.tile(bias_c, N).reshape(N * C, 1)

    y2d = pallas_normalize_2d(x.reshape(N * C, H * W), scale_row, bias_row)
    return y2d.reshape(N, C, H, W)


# ----------------------------------------------------------------------------
# Self-test
# ----------------------------------------------------------------------------

if __name__ == "__main__":
    key = jax.random.PRNGKey(0)
    kx, kmu, kstd = jax.random.split(key, 3)

    N, C, H, W = 2, 4, 16, 16
    x = jax.random.normal(kx, (N, C, H, W), jnp.float32)
    mu = 0.5 * jax.random.normal(kmu, (C, 1, 1), jnp.float32)
    std = 0.5 + 0.5 * jnp.abs(jax.random.normal(kstd, (C, 1, 1), jnp.float32))

    # f32, lane-aligned spatial extent (H*W = 256).
    out = jax.block_until_ready(normalize_forward(x, mu, std))
    ref = (x - mu) / std
    assert out.shape == (N, C, H, W) and out.dtype == x.dtype
    assert bool(jnp.all(jnp.isfinite(out)))
    assert bool(jnp.allclose(out, ref, rtol=1e-5, atol=1e-5))

    # bf16 passthrough: bf16 in HBM / bf16 out, f32 math inside the kernel.
    x_bf16 = x.astype(jnp.bfloat16)
    out_bf = jax.block_until_ready(normalize_forward(x_bf16, mu, std))
    ref_bf = (x_bf16.astype(jnp.float32) - mu) / std
    assert out_bf.dtype == jnp.bfloat16
    assert bool(jnp.allclose(out_bf.astype(jnp.float32), ref_bf, rtol=2e-2, atol=2e-2))

    # Unaligned spatial extent (H*W = 30): full-extent lane block, no pad/slice.
    xs = jax.random.normal(kx, (N, C, 5, 6), jnp.float32)
    out_s = jax.block_until_ready(normalize_forward(xs, mu, std))
    ref_s = (xs - mu) / std
    assert bool(jnp.allclose(out_s, ref_s, rtol=1e-5, atol=1e-5))

    print("KERNEL_OK")
</pallas_src>

<mosaic_0001>
module attributes {stable_mosaic.version = 11 : i64} {
  func.func @_normalize_kernel(%arg0: i32, %arg1: i32, %arg2: memref<8x256xf32, #tpu.memory_space<vmem>>, %arg3: memref<8x1xf32, #tpu.memory_space<vmem>>, %arg4: memref<8x1xf32, #tpu.memory_space<vmem>>, %arg5: memref<8x256xf32, #tpu.memory_space<vmem>>) attributes {dimension_semantics = [#tpu.dimension_semantics<parallel>, #tpu.dimension_semantics<parallel>], iteration_bounds = array<i64: 1, 1>, scalar_prefetch = 0 : i64, scratch_operands = 0 : i64, tpu.core_type = #tpu.core_type<tc>, window_params = [{transform_indices = @transform_0, window_bounds = array<i64: 8, 256>}, {transform_indices = @transform_1, window_bounds = array<i64: 8, 1>}, {transform_indices = @transform_2, window_bounds = array<i64: 8, 1>}, {transform_indices = @transform_3, window_bounds = array<i64: 8, 256>}]} {
    %c0 = arith.constant 0 : index
    %c0_0 = arith.constant 0 : index
    %0 = vector.load %arg2[%c0, %c0_0] : memref<8x256xf32, #tpu.memory_space<vmem>>, vector<8x256xf32>
    %c0_1 = arith.constant 0 : index
    %c0_2 = arith.constant 0 : index
    %1 = vector.load %arg3[%c0_1, %c0_2] : memref<8x1xf32, #tpu.memory_space<vmem>>, vector<8x1xf32>
    %2 = vector.broadcast %1 : vector<8x1xf32> to vector<8x256xf32>
    %3 = arith.mulf %0, %2 : vector<8x256xf32>
    %c0_3 = arith.constant 0 : index
    %c0_4 = arith.constant 0 : index
    %4 = vector.load %arg4[%c0_3, %c0_4] : memref<8x1xf32, #tpu.memory_space<vmem>>, vector<8x1xf32>
    %5 = vector.broadcast %4 : vector<8x1xf32> to vector<8x256xf32>
    %6 = arith.addf %3, %5 : vector<8x256xf32>
    %c0_5 = arith.constant 0 : index
    %c0_6 = arith.constant 0 : index
    %7 = vector.load %arg5[%c0_5, %c0_6] : memref<8x256xf32, #tpu.memory_space<vmem>>, vector<8x256xf32>
    tpu.vector_store %arg5[%c0_5, %c0_6], %6 {strides = array<i32>} : memref<8x256xf32, #tpu.memory_space<vmem>>, vector<8x256xf32>,
    return
  }
  func.func @transform_0(%arg0: i32, %arg1: i32) -> (i32, i32) {
    %c0_i32 = arith.constant 0 : i32
    return %arg0, %arg1 : i32, i32
  }
  func.func @transform_1(%arg0: i32, %arg1: i32) -> (i32, i32) {
    %c0_i32 = arith.constant 0 : i32
    %c0_i32_0 = arith.constant 0 : i32
    return %arg0, %c0_i32 : i32, i32
  }
  func.func @transform_2(%arg0: i32, %arg1: i32) -> (i32, i32) {
    %c0_i32 = arith.constant 0 : i32
    %c0_i32_0 = arith.constant 0 : i32
    return %arg0, %c0_i32 : i32, i32
  }
  func.func @transform_3(%arg0: i32, %arg1: i32) -> (i32, i32) {
    %c0_i32 = arith.constant 0 : i32
    return %arg0, %arg1 : i32, i32
  }
}

</mosaic_0001>

<llo_original>
// kernel: tpu_custom_call.1
$region0: #{tpu_custom_call.1}
  #allocation0 [shape = 'u32[]', space=smem, size = 0x4, offset = 0x4, fixed_abs, tag = 'smem constant byte address 0x4 - core index']
  #allocation1 [shape = 'u32[72,128]{1,0:T(1,128)}', space=vmem, size = 0x9000, scoped, tag = 'internal scratch']
  %s0 = inlined_call_operand.vmem [shape: f32[8,256], index: 0, kind: input, shape index: {}]
  %s1 = inlined_call_operand.vmem [shape: f32[8,1], index: 1, kind: input, shape index: {}]
  %s2 = inlined_call_operand.vmem [shape: f32[8,1], index: 2, kind: input, shape index: {}]
  %s3 = inlined_call_operand.hbm [shape: f32[8,256], index: 3, kind: output, shape index: {}]
  %s4 = sld [smem:[#allocation0]]
  $region22: #{tpu_custom_call.1} parent=0
    _
  %s6 = ssub.s32 1, %s4
  %s7 = scalar_select 0, %s6, %s4
  $region1: #{tpu_custom_call.1} parent=0
    #allocation2 [shape = 'u8[8192]{0}', space=vmem, size = 0x2000, scoped, tag = 'output window, operand 0, single buffered']
    #allocation3 [shape = 's32[1]{0}', space=sflag, size = 0x4, scoped, tag = 'scoped memory for tpu_custom_call.1']
    %8 = vsyncpa [#allocation3], 0
    // Predicated region
    $region2: #{tpu_custom_call.1} parent=1 // pred_check
      _
    $region3: #{tpu_custom_call.1} parent=1 // pred_check_branch
      %10 = sbr.rel (0) target = $region5
    $region4: #{tpu_custom_call.1} parent=1 // pred_region
      _
    $region5: #{tpu_custom_call.1} parent=1 // pred_fallthru
      _
    // Predicated region
    $region6: #{tpu_custom_call.1} parent=1 // pred_check
      _
    $region7: #{tpu_custom_call.1} parent=1 // pred_check_branch
      %12 = sbr.rel (0) target = $region9
    $region8: #{tpu_custom_call.1} parent=1 // pred_region
      _
    $region9: #{tpu_custom_call.1} parent=1 // pred_fallthru
      _
    // Predicated region
    $region10: #{tpu_custom_call.1} parent=1 // pred_check
      _
    $region11: #{tpu_custom_call.1} parent=1 // pred_check_branch
      %14 = sbr.rel (0) target = $region13
    $region12: #{tpu_custom_call.1} parent=1 // pred_region
      _
    $region13: #{tpu_custom_call.1} parent=1 // pred_fallthru
      _
    %v15 = vld [vmem:[%s0] sm:$0xff]
    %v16 = vld [vmem:[%s0 + $0x8] sm:$0xff]
    %v17 = vld [vmem:[%s1] sm:$0xff]
    %19 = vset.pattern.permute.xlu0 0
    %20 = vperm.xlu0 %19, %v17
    %v21 = vpop.permute.xlu0 %20
    %v23 = vmul.f32 %v15, %v21
    %v24 = vmul.f32 %v16, %v21
    %v25 = vld [vmem:[%s2] sm:$0xff]
    %27 = vset.pattern.permute.xlu0 0
    %28 = vperm.xlu0 %27, %v25
    %v29 = vpop.permute.xlu0 %28
    %v31 = vadd.f32 %v23, %v29
    %v32 = vadd.f32 %v24, %v29
    %33 = vst [vmem:[#allocation2] sm:$0xff] %v31
    %34 = vst [vmem:[#allocation2 + $0x8] sm:$0xff] %v32
    // Predicated region
    $region14: #{tpu_custom_call.1} parent=1 // pred_check
      _
    $region15: #{tpu_custom_call.1} parent=1 // pred_check_branch
      %36 = sbr.rel (0) target = $region17
    $region16: #{tpu_custom_call.1} parent=1 // pred_region
      %38 = vsyncadd [#allocation3], 0
      %s40 = sshll.u32 [#allocation2], 4
      %s41 = int_to_ptr.vmem [resolvable:$true] %s40
      %s42 = sshll.u32 %s3, 4
      %s43 = int_to_ptr.hbm [resolvable:$true] %s42
      %45 = dma.vmem_to_hbm [thread:$0]  %s41, 256, %s43, [#allocation3]
    $region17: #{tpu_custom_call.1} parent=1 // pred_fallthru
      _
    // Predicated region
    $region18: #{tpu_custom_call.1} parent=1 // pred_check
      _
    $region19: #{tpu_custom_call.1} parent=1 // pred_check_branch
      %47 = sbr.rel (0) target = $region21
    $region20: #{tpu_custom_call.1} parent=1 // pred_region
      %49 = dma.done [#allocation3], 256
    $region21: #{tpu_custom_call.1} parent=1 // pred_fallthru
      _
    %50 = vsyncpa [#allocation3], 1

</llo_original>
